<compile_context>
chip_gen: v7x
topology: tpu7x:2x2x1
jax: 0.10.0
libtpu: 0.0.40
codegen_flags: <defaults>
</compile_context>

<pallas_src>
import functools

import jax
import jax.numpy as jnp
from jax import lax
from jax.experimental import pallas as pl
from jax.experimental.pallas import tpu as pltpu


def _nce_softmax_loss_kernel(x_ref, part_ref, m_sc, s_sc, x0_sc, *,
                             batch, n_classes, tb, tn,
                             mask_cols, mask_rows):
    i = pl.program_id(0)       # batch-tile index  ("parallel")
    k = pl.program_id(1)       # class-tile index  ("arbitrary", reduction, last)
    nk = pl.num_programs(1)

    # Per-chunk upcast: HBM traffic stays in the input dtype; the f32 temp is
    # one (tb, tn) tile, bounded by the tile choice. No-op for f32 inputs.
    x = x_ref[...].astype(jnp.float32)

    @pl.when(k == 0)
    def _init():
        m_sc[...] = jnp.full_like(m_sc, -jnp.inf)
        s_sc[...] = jnp.zeros_like(s_sc)
        # Positive-class (class 0) logit; column 0 is never padded.
        x0_sc[...] = x[:, 0:1]

    def _update(xv):
        # Online logsumexp over the class axis; all row-wise intermediates stay
        # 2-D (tb, 1) (natural sublane layout, no 1-D relayouts).
        m_prev = m_sc[...]
        m_new = jnp.maximum(m_prev, jnp.max(xv, axis=1, keepdims=True))
        s_sc[...] = s_sc[...] * jnp.exp(m_prev - m_new) + jnp.sum(
            jnp.exp(xv - m_new), axis=1, keepdims=True)
        m_sc[...] = m_new

    if mask_cols:
        # Only the last class tile can have padded columns (nk = cdiv(N, tn)).
        # Gate the mask so non-last chunks pay zero VALU cost for it.
        @pl.when(k < nk - 1)
        def _full_chunk():
            _update(x)

        @pl.when(k == nk - 1)
        def _last_chunk():
            col = lax.broadcasted_iota(jnp.int32, (tb, tn), 1) + k * tn
            _update(jnp.where(col < n_classes, x, -jnp.inf))
    else:
        _update(x)

    @pl.when(k == nk - 1)
    def _finalize():
        lse = m_sc[...] + jnp.log(s_sc[...])          # (tb, 1)
        per_row = lse - x0_sc[...]                    # -log softmax(x)[:, 0]
        if mask_rows:
            # Only emitted when B % tb != 0; discards padded-row garbage
            # (select semantics drop NaN/Inf from over-read rows).
            row = lax.broadcasted_iota(jnp.int32, (tb, 1), 0) + i * tb
            per_row = jnp.where(row < batch, per_row, 0.0)
        # Lane/sublane-dense (1, 8, 128) partial-sum block -> unmasked store.
        part_ref[...] = jnp.broadcast_to(
            jnp.sum(per_row).astype(jnp.float32), part_ref.shape)


def nce_softmax_loss(x: jax.Array, *, tb: int | None = None,
                     tn: int | None = None) -> jax.Array:
    """Compute -log(softmax(x, axis=1)[:, 0]).mean() with a Pallas TPU kernel.

    Args:
      x: [batch, num_classes] logits (any float dtype; kept in that dtype in HBM).
      tb, tn: optional batch / class tile sizes (defaults sized for VMEM / HBM
        grain size).
    Returns:
      scalar float32 loss.
    """
    B, N = x.shape
    itemsize = jnp.dtype(x.dtype).itemsize
    # Dtype-native sublane tile: 8 for 32-bit, 16 for 16-bit, 32 for 8-bit.
    sub = max(8, 32 // max(1, itemsize))

    # Class tile: default 2048 so each grid step moves >= 4 MiB of f32 from HBM
    # (amortizes ~0.35 us/step pipeline overhead, fewer rescale passes).
    if tn is None:
        tn = 2048
    tn = min(tn, N)
    if tn < N:                                   # keep lane tiling legal
        tn = min(N, ((tn + 127) // 128) * 128)

    # Batch tile: default 512; if B fits in <= 2 default tiles (and is big
    # enough), split into two so the "parallel" axis feeds both v7x TensorCores.
    if tb is None:
        tb = 512
        if B <= 2 * tb and B >= 2 * sub:
            half = (B + 1) // 2
            tb = ((half + sub - 1) // sub) * sub
    tb = min(tb, B)
    if tb < B:                                   # keep sublane tiling legal
        tb = min(B, ((tb + sub - 1) // sub) * sub)

    nb = pl.cdiv(B, tb)
    nk = pl.cdiv(N, tn)

    # Static masking flags: masks are only emitted when a remainder exists.
    mask_cols = (N % tn) != 0
    mask_rows = (B % tb) != 0

    kernel = functools.partial(
        _nce_softmax_loss_kernel, batch=B, n_classes=N, tb=tb, tn=tn,
        mask_cols=mask_cols, mask_rows=mask_rows)

    cost = pl.CostEstimate(
        flops=4 * B * N,
        transcendentals=B * N,
        bytes_accessed=B * N * itemsize + nb * 8 * 128 * 4,
    )

    partials = pl.pallas_call(
        kernel,
        out_shape=jax.ShapeDtypeStruct((nb, 8, 128), jnp.float32),
        grid_spec=pltpu.PrefetchScalarGridSpec(
            num_scalar_prefetch=0,
            grid=(nb, nk),
            in_specs=[pl.BlockSpec((tb, tn), lambda i, k: (i, k))],
            out_specs=pl.BlockSpec((1, 8, 128), lambda i, k: (i, 0, 0)),
            scratch_shapes=[
                pltpu.VMEM((tb, 1), jnp.float32),   # running max m
                pltpu.VMEM((tb, 1), jnp.float32),   # running sum of exp
                pltpu.VMEM((tb, 1), jnp.float32),   # positive-class logit
            ],
        ),
        compiler_params=pltpu.CompilerParams(
            dimension_semantics=("parallel", "arbitrary"),
            # 512x2048 f32: ~8 MiB double-buffered input + ~8-12 MiB temps;
            # 48 MiB stays under v7x's 64 MiB physical VMEM with headroom.
            vmem_limit_bytes=48 * 1024 * 1024,
        ),
        cost_estimate=cost,
    )(x)

    # Tiny final reduction over per-tile partials; divide by the true B.
    return jnp.sum(partials[:, 0, 0]) / jnp.float32(B)


def _reference(x: jax.Array) -> jax.Array:
    p = jax.nn.softmax(x.astype(jnp.float32), axis=1)
    return -jnp.mean(jnp.log(p[:, 0]))


if __name__ == "__main__":
    key = jax.random.PRNGKey(0)
    k1, k2, k3 = jax.random.split(key, 3)

    # Case 1: single-tile path (batch=8, num_classes=128 -> K=127 negatives).
    x1 = jax.random.normal(k1, (8, 128), dtype=jnp.float32)
    loss1 = nce_softmax_loss(x1)
    jax.block_until_ready(loss1)
    ref1 = _reference(x1)
    assert jnp.allclose(loss1, ref1, rtol=1e-5, atol=1e-5), (loss1, ref1)

    # Case 2: multi-tile path with batch AND class remainders (exercises the
    # gated padded-row / padded-column masking and the online logsumexp).
    x2 = jax.random.normal(k2, (40, 200), dtype=jnp.float32)
    loss2 = nce_softmax_loss(x2, tb=16, tn=128)
    jax.block_until_ready(loss2)
    ref2 = _reference(x2)
    assert jnp.allclose(loss2, ref2, rtol=1e-5, atol=1e-5), (loss2, ref2)

    # Case 3: bf16 input, default tiles (dtype-native sublane rounding and the
    # >=2-batch-tile default path; mask_cols is statically elided here).
    x3 = jax.random.normal(k3, (40, 200), dtype=jnp.float32).astype(jnp.bfloat16)
    loss3 = nce_softmax_loss(x3)
    jax.block_until_ready(loss3)
    ref3 = _reference(x3)
    assert jnp.allclose(loss3, ref3, rtol=1e-3, atol=1e-3), (loss3, ref3)

    print("KERNEL_OK")
</pallas_src>

<mosaic_0001>
module attributes {stable_mosaic.version = 11 : i64} {
  func.func @_nce_softmax_loss_kernel(%arg0: i32, %arg1: i32, %arg2: memref<8x128xf32, #tpu.memory_space<vmem>>, %arg3: memref<1x8x128xf32, #tpu.memory_space<vmem>>, %arg4: memref<8x1xf32, #tpu.memory_space<vmem>>, %arg5: memref<8x1xf32, #tpu.memory_space<vmem>>, %arg6: memref<8x1xf32, #tpu.memory_space<vmem>>) attributes {dimension_semantics = [#tpu.dimension_semantics<parallel>, #tpu.dimension_semantics<arbitrary>], iteration_bounds = array<i64: 1, 1>, scalar_prefetch = 0 : i64, scratch_operands = 3 : i64, tpu.core_type = #tpu.core_type<tc>, window_params = [{transform_indices = @transform_0, window_bounds = array<i64: 8, 128>}, {transform_indices = @transform_1, window_bounds = array<i64: 1, 8, 128>}]} {
    %c0 = arith.constant 0 : index
    %c0_0 = arith.constant 0 : index
    %0 = vector.load %arg2[%c0, %c0_0] : memref<8x128xf32, #tpu.memory_space<vmem>>, vector<8x128xf32>
    %c0_i32 = arith.constant 0 : i32
    %1 = arith.cmpi eq, %arg1, %c0_i32 : i32
    %2 = arith.extui %1 : i1 to i32
    %c0_i32_1 = arith.constant 0 : i32
    %3 = arith.cmpi ne, %2, %c0_i32_1 : i32
    scf.if %3 {
      %cst_13 = arith.constant 0xFF800000 : f32
      %23 = vector.broadcast %cst_13 : f32 to vector<8x1xf32>
      %c0_14 = arith.constant 0 : index
      %c0_15 = arith.constant 0 : index
      %24 = vector.load %arg4[%c0_14, %c0_15] : memref<8x1xf32, #tpu.memory_space<vmem>>, vector<8x1xf32>
      tpu.vector_store %arg4[%c0_14, %c0_15], %23 {strides = array<i32>} : memref<8x1xf32, #tpu.memory_space<vmem>>, vector<8x1xf32>,
      %cst_16 = arith.constant 0.000000e+00 : f32
      %25 = vector.broadcast %cst_16 : f32 to vector<8x1xf32>
      %c0_17 = arith.constant 0 : index
      %c0_18 = arith.constant 0 : index
      %26 = vector.load %arg5[%c0_17, %c0_18] : memref<8x1xf32, #tpu.memory_space<vmem>>, vector<8x1xf32>
      tpu.vector_store %arg5[%c0_17, %c0_18], %25 {strides = array<i32>} : memref<8x1xf32, #tpu.memory_space<vmem>>, vector<8x1xf32>,
      %27 = vector.extract_strided_slice %0 {offsets = [0, 0], sizes = [8, 1], strides = [1, 1]} : vector<8x128xf32> to vector<8x1xf32>
      %c0_19 = arith.constant 0 : index
      %c0_20 = arith.constant 0 : index
      %28 = vector.load %arg6[%c0_19, %c0_20] : memref<8x1xf32, #tpu.memory_space<vmem>>, vector<8x1xf32>
      tpu.vector_store %arg6[%c0_19, %c0_20], %27 {strides = array<i32>} : memref<8x1xf32, #tpu.memory_space<vmem>>, vector<8x1xf32>,
    } else {
    }
    %c0_2 = arith.constant 0 : index
    %c0_3 = arith.constant 0 : index
    %4 = vector.load %arg4[%c0_2, %c0_3] : memref<8x1xf32, #tpu.memory_space<vmem>>, vector<8x1xf32>
    %cst = arith.constant dense<0xFF800000> : vector<8xf32>
    %5 = vector.multi_reduction <maximumf>, %0, %cst [1] : vector<8x128xf32> to vector<8xf32>
    %6 = vector.shape_cast %5 : vector<8xf32> to vector<8x1xf32>
    %7 = arith.maximumf %4, %6 : vector<8x1xf32>
    %c0_4 = arith.constant 0 : index
    %c0_5 = arith.constant 0 : index
    %8 = vector.load %arg5[%c0_4, %c0_5] : memref<8x1xf32, #tpu.memory_space<vmem>>, vector<8x1xf32>
    %9 = arith.subf %4, %7 : vector<8x1xf32>
    %10 = math.exp %9 : vector<8x1xf32>
    %11 = arith.mulf %8, %10 : vector<8x1xf32>
    %12 = vector.broadcast %7 : vector<8x1xf32> to vector<8x128xf32>
    %13 = arith.subf %0, %12 : vector<8x128xf32>
    %14 = math.exp %13 : vector<8x128xf32>
    %cst_6 = arith.constant dense<0.000000e+00> : vector<8xf32>
    %15 = vector.multi_reduction <add>, %14, %cst_6 [1] : vector<8x128xf32> to vector<8xf32>
    %16 = vector.shape_cast %15 : vector<8xf32> to vector<8x1xf32>
    %17 = arith.addf %11, %16 : vector<8x1xf32>
    %c0_7 = arith.constant 0 : index
    %c0_8 = arith.constant 0 : index
    %18 = vector.load %arg5[%c0_7, %c0_8] : memref<8x1xf32, #tpu.memory_space<vmem>>, vector<8x1xf32>
    tpu.vector_store %arg5[%c0_7, %c0_8], %17 {strides = array<i32>} : memref<8x1xf32, #tpu.memory_space<vmem>>, vector<8x1xf32>,
    %c0_9 = arith.constant 0 : index
    %c0_10 = arith.constant 0 : index
    %19 = vector.load %arg4[%c0_9, %c0_10] : memref<8x1xf32, #tpu.memory_space<vmem>>, vector<8x1xf32>
    tpu.vector_store %arg4[%c0_9, %c0_10], %7 {strides = array<i32>} : memref<8x1xf32, #tpu.memory_space<vmem>>, vector<8x1xf32>,
    %c0_i32_11 = arith.constant 0 : i32
    %20 = arith.cmpi eq, %arg1, %c0_i32_11 : i32
    %21 = arith.extui %20 : i1 to i32
    %c0_i32_12 = arith.constant 0 : i32
    %22 = arith.cmpi ne, %21, %c0_i32_12 : i32
    scf.if %22 {
      %c0_13 = arith.constant 0 : index
      %c0_14 = arith.constant 0 : index
      %23 = vector.load %arg4[%c0_13, %c0_14] : memref<8x1xf32, #tpu.memory_space<vmem>>, vector<8x1xf32>
      %c0_15 = arith.constant 0 : index
      %c0_16 = arith.constant 0 : index
      %24 = vector.load %arg5[%c0_15, %c0_16] : memref<8x1xf32, #tpu.memory_space<vmem>>, vector<8x1xf32>
      %25 = math.log %24 : vector<8x1xf32>
      %26 = arith.addf %23, %25 : vector<8x1xf32>
      %c0_17 = arith.constant 0 : index
      %c0_18 = arith.constant 0 : index
      %27 = vector.load %arg6[%c0_17, %c0_18] : memref<8x1xf32, #tpu.memory_space<vmem>>, vector<8x1xf32>
      %28 = arith.subf %26, %27 : vector<8x1xf32>
      %29 = vector.shape_cast %28 : vector<8x1xf32> to vector<1x8x1xf32>
      %cst_19 = arith.constant dense<0.000000e+00> : vector<1xf32>
      %30 = vector.multi_reduction <add>, %29, %cst_19 [1, 2] : vector<1x8x1xf32> to vector<1xf32>
      %31 = vector.shape_cast %30 : vector<1xf32> to vector<1x1x1xf32>
      %32 = vector.extract %31[0, 0, 0] : f32 from vector<1x1x1xf32>
      %33 = vector.broadcast %32 : f32 to vector<1x8x128xf32>
      %c0_20 = arith.constant 0 : index
      %c0_21 = arith.constant 0 : index
      %c0_22 = arith.constant 0 : index
      %34 = vector.load %arg3[%c0_20, %c0_21, %c0_22] : memref<1x8x128xf32, #tpu.memory_space<vmem>>, vector<1x8x128xf32>
      tpu.vector_store %arg3[%c0_20, %c0_21, %c0_22], %33 {strides = array<i32>} : memref<1x8x128xf32, #tpu.memory_space<vmem>>, vector<1x8x128xf32>,
    } else {
    }
    return
  }
  func.func @transform_0(%arg0: i32, %arg1: i32) -> (i32, i32) {
    %c0_i32 = arith.constant 0 : i32
    return %arg0, %arg1 : i32, i32
  }
  func.func @transform_1(%arg0: i32, %arg1: i32) -> (i32, i32, i32) {
    %c0_i32 = arith.constant 0 : i32
    %c0_i32_0 = arith.constant 0 : i32
    %c0_i32_1 = arith.constant 0 : i32
    return %arg0, %c0_i32, %c0_i32_0 : i32, i32, i32
  }
}

</mosaic_0001>

<llo_original>
// kernel: tpu_custom_call.1
$region0: #{tpu_custom_call.1}
  #allocation0 [shape = 'u32[]', space=smem, size = 0x4, offset = 0x4, fixed_abs, tag = 'smem constant byte address 0x4 - core index']
  #allocation1 [shape = 'u32[144,128]{1,0:T(1,128)}', space=vmem, size = 0x12000, scoped, tag = 'internal scratch']
  #allocation2 [shape = 'f32[8,1]{1,0:T(8,128)}', space=vmem, size = 0x1000, scoped, tag = 'scratch operand']
  #allocation3 [shape = 'f32[8,1]{1,0:T(8,128)}', space=vmem, size = 0x1000, scoped, tag = 'scratch operand']
  #allocation4 [shape = 'f32[8,1]{1,0:T(8,128)}', space=vmem, size = 0x1000, scoped, tag = 'scratch operand']
  %s0 = inlined_call_operand.hbm [shape: f32[8,128], index: 0, kind: input, shape index: {}]
  %s1 = inlined_call_operand.hbm [shape: f32[1,8,128], index: 1, kind: output, shape index: {}]
  %s2 = sld [smem:[#allocation0]]
  $region26: #{tpu_custom_call.1} parent=0
    _
  %s4 = ssub.s32 1, %s2
  %s5 = scalar_select 0, %s4, %s2
  $region1: #{tpu_custom_call.1} parent=0
    #allocation5 [shape = 'u8[4096]{0}', space=vmem, size = 0x1000, scoped, tag = 'input window, operand 0, single buffered']
    #allocation6 [shape = 's32[1]{0}', space=sflag, size = 0x4, scoped, tag = 'scoped memory for tpu_custom_call.1']
    #allocation7 [shape = 's32[1]{0}', space=sflag, size = 0x4, scoped, tag = 'scoped memory for tpu_custom_call.1']
    #allocation8 [shape = 'u8[4096]{0}', space=vmem, size = 0x1000, scoped, tag = 'output window, operand 0, single buffered']
    %6 = vsyncpa [#allocation6], 0
    %7 = vsyncpa [#allocation7], 0
    // Predicated region
    $region2: #{tpu_custom_call.1} parent=1 // pred_check
      _
    $region3: #{tpu_custom_call.1} parent=1 // pred_check_branch
      %9 = sbr.rel (0) target = $region5
    $region4: #{tpu_custom_call.1} parent=1 // pred_region
      %s11 = ssub.s32 128, 128
      %12 = vsyncadd [#allocation6], %s11
      %s14 = sshll.u32 [#allocation5], 4
      %s15 = int_to_ptr.vmem [resolvable:$true] %s14
      %17 = dma.hbm_to_vmem [thread:$0]  %s0, 128, %s15, [#allocation6]
    $region5: #{tpu_custom_call.1} parent=1 // pred_fallthru
      _
    // Predicated region
    $region6: #{tpu_custom_call.1} parent=1 // pred_check
      _
    $region7: #{tpu_custom_call.1} parent=1 // pred_check_branch
      %19 = sbr.rel (0) target = $region9
    $region8: #{tpu_custom_call.1} parent=1 // pred_region
      %20 = dma.done [#allocation6], 128
    $region9: #{tpu_custom_call.1} parent=1 // pred_fallthru
      _
    %v21 = vld [vmem:[#allocation5] sm:$0xff]
    %p22 = scmp.eq.s32.totalorder 0, 0
    // Predicated region
    $region10: #{tpu_custom_call.1} parent=1 // pred_check
      %p23 = pneg %p22
    $region11: #{tpu_custom_call.1} parent=1 // pred_check_branch
      %25 = sbr.rel (%p23) target = $region13
    $region12: #{tpu_custom_call.1} parent=1 // pred_region
      %vm26 = vcmask 7168
      %27 = vst.msk [vmem:[#allocation2] sm:$0xff] %vm26, -inf
      %28 = vst.msk [vmem:[#allocation3] sm:$0xff] %vm26, 0.0
      %29 = vst.msk [vmem:[#allocation4] sm:$0xff] %vm26, %v21
    $region13: #{tpu_custom_call.1} parent=1 // pred_fallthru
      _
    %v30 = vld [vmem:[#allocation2] sm:$0xff]
    %31 = vmax.xlane.f32.xlu0 %v21
    %v32 = vpop.xlane.xlu0 %31
    %v33 = vmax.f32 %v30, %v32
    %v34 = vld [vmem:[#allocation3] sm:$0xff]
    %v35 = vsub.f32 %v30, %v33
    %v36 = vmul.f32 %v35, 1.442695
    %v37 = vpow.pop %v36
    %v38 = vmul.f32 %v34, %v37
    %40 = vset.pattern.permute.xlu0 0
    %41 = vperm.xlu0 %40, %v33
    %v42 = vpop.permute.xlu0 %41
    %v44 = vsub.f32 %v21, %v42
    %v45 = vmul.f32 %v44, 1.442695
    %v46 = vpow.pop %v45
    %47 = vadd.xlane.f32.xlu0 %v46
    %v48 = vpop.xlane.xlu0 %47
    %v49 = vadd.f32 %v38, %v48
    %vm50 = vcmask 7168
    %51 = vst.msk [vmem:[#allocation3] sm:$0xff] %vm50, %v49
    %52 = vst.msk [vmem:[#allocation2] sm:$0xff] %vm50, %v33
    // Predicated region
    $region14: #{tpu_custom_call.1} parent=1 // pred_check
      %p53 = pneg %p22
    $region15: #{tpu_custom_call.1} parent=1 // pred_check_branch
      %55 = sbr.rel (%p53) target = $region17
    $region16: #{tpu_custom_call.1} parent=1 // pred_region
      %v56 = vld [vmem:[#allocation2] sm:$0xff]
      %v57 = vld [vmem:[#allocation3] sm:$0xff]
      %v58 = vlog2.pop %v57
      %v59 = vmul.f32 %v58, 0.6931472
      %v60 = vadd.f32 %v56, %v59
      %v61 = vld [vmem:[#allocation4] sm:$0xff]
      %v62 = vsub.f32 %v60, %v61
      %v63 = vsel %vm50, %v62, 0.0
      %64 = vadd.xlane.f32.xlu0 %v63
      %v65 = vpop.xlane.xlu0 %64
      %v66 = vrot.slane %v65, 4
      %v67 = vadd.f32 %v65, %v66
      %v68 = vrot.slane %v67, 2
      %v69 = vadd.f32 %v67, %v68
      %v70 = vrot.slane %v69, 1
      %v71 = vadd.f32 %v69, %v70
      %s72 = vtos %v71
      %v73 = vstv %s72
      %74 = vst [vmem:[#allocation8] sm:$0xff] %v73
    $region17: #{tpu_custom_call.1} parent=1 // pred_fallthru
      _
    // Predicated region
    $region18: #{tpu_custom_call.1} parent=1 // pred_check
      _
    $region19: #{tpu_custom_call.1} parent=1 // pred_check_branch
      %76 = sbr.rel (0) target = $region21
    $region20: #{tpu_custom_call.1} parent=1 // pred_region
      %s78 = ssub.s32 128, 128
      %79 = vsyncadd [#allocation7], %s78
      %s81 = sshll.u32 [#allocation8], 4
      %s82 = int_to_ptr.vmem [resolvable:$true] %s81
      %84 = dma.vmem_to_hbm [thread:$0]  %s82, 128, %s1, [#allocation7]
    $region21: #{tpu_custom_call.1} parent=1 // pred_fallthru
      _
    // Predicated region
    $region22: #{tpu_custom_call.1} parent=1 // pred_check
      _
    $region23: #{tpu_custom_call.1} parent=1 // pred_check_branch
      %86 = sbr.rel (0) target = $region25
    $region24: #{tpu_custom_call.1} parent=1 // pred_region
      %87 = dma.done [#allocation7], 128
    $region25: #{tpu_custom_call.1} parent=1 // pred_fallthru
      _
    %88 = vsyncpa [#allocation6], 1
    %89 = vsyncpa [#allocation7], 1

</llo_original>
